<compile_context>
chip_gen: v7x
topology: tpu7x:2x2x1
jax: 0.10.0
libtpu: 0.0.40
codegen_flags: <defaults>
</compile_context>

<pallas_src>
import functools
import math

import jax
import jax.numpy as jnp
from jax import lax
from jax.experimental import pallas as pl
from jax.experimental.pallas import tpu as pltpu


def _round_up(x, m):
    return (x + m - 1) // m * m


def _choose_tile(dim, max_tile, quantum):
    """Tile size: multiple of `quantum`, <= max(max_tile, quantum).

    Prefers a tile that exactly divides the quantum-padded dim so no extra
    padding (and no output slice) is needed for large dims.
    """
    dim_q = _round_up(max(dim, 1), quantum)
    max_tile = max(quantum, (max_tile // quantum) * quantum)
    if dim_q <= max_tile:
        return dim_q
    lo = max(quantum, (max_tile // 2 // quantum) * quantum)
    t = max_tile
    while t >= lo:
        if dim_q % t == 0:
            return t
        t -= quantum
    return max_tile


def _vmem_cap_bytes():
    """~80% of physical VMEM (headroom for Mosaic scratch), clamped."""
    phys = 64 * 1024 * 1024            # conservative default (v7x per-TensorCore)
    try:
        info = pltpu.get_tpu_info()
        phys = int(getattr(info, "vmem_capacity_bytes", phys)) or phys
    except Exception:
        pass
    return int(min(max(phys * 8 // 10, 32 * 1024 * 1024), 112 * 1024 * 1024))


def _attn_vmem_bytes(tb, lp, e, dt):
    f32 = 4
    blocked = 2 * (tb * lp * f32 + lp * e * dt + e * e * dt + tb * e * dt)
    gather = 2 * tb * lp * e * dt                   # gathered sender/temporal rows
    temps = 6 * tb * lp * e * f32 + 6 * tb * lp * f32   # f32 upcasts / products / softmax
    return blocked + gather + temps + (2 << 20)


def _gemm_vmem_bytes(tb, tn, e, dt, ob):
    blocked = 2 * (tb * e * dt + e * tn * dt + tb * tn * ob)
    temps = tb * tn * 4                             # f32 accumulator before cast
    return blocked + temps + (2 << 20)


# --------------------------------------------------------------------------
# Kernel A: fused embedding gather + co-attention -> attended (B, E)
# --------------------------------------------------------------------------
def _attention_kernel(ex_ref, mask_ref, pos_ref, w_ref, sender_hbm, temporal_hbm,
                      att_ref, s_buf, t_buf, sem, *,
                      valid_len, window, approx_recip):
    TB, Lp = mask_ref.shape
    E = pos_ref.shape[-1]
    TBL = TB * Lp
    base = pl.program_id(0) * TBL

    # ---- per-row DMA gather from HBM tables (windowed issue/wait) ----------
    def _start(r):
        idx = ex_ref[base + r]
        pltpu.make_async_copy(sender_hbm.at[pl.ds(idx, 1)],
                              s_buf.at[pl.ds(r, 1)], sem.at[0]).start()
        pltpu.make_async_copy(temporal_hbm.at[pl.ds(idx, 1)],
                              t_buf.at[pl.ds(r, 1)], sem.at[1]).start()

    def _wait(r):
        pltpu.make_async_copy(sender_hbm.at[pl.ds(0, 1)],
                              s_buf.at[pl.ds(r, 1)], sem.at[0]).wait()
        pltpu.make_async_copy(temporal_hbm.at[pl.ds(0, 1)],
                              t_buf.at[pl.ds(r, 1)], sem.at[1]).wait()

    W = min(window, TBL)

    @pl.loop(0, TBL)
    def _issue(r):
        _start(r)

        @pl.when(r >= W)
        def _():
            _wait(r - W)

    @pl.loop(TBL - W, TBL)
    def _drain(r):
        _wait(r)

    # ---- attention math (f32 elementwise / softmax; MXU matmul f32 acc) ----
    m = mask_ref[...][:, :, None]                                    # (TB, Lp, 1)
    pos = pos_ref[...].astype(jnp.float32)[None, :, :]               # (1, Lp, E)
    s = s_buf[...].astype(jnp.float32).reshape(TB, Lp, E) * m        # (TB, Lp, E)
    t = t_buf[...].astype(jnp.float32).reshape(TB, Lp, E) * m + pos  # (TB, Lp, E)

    proj = jnp.dot(
        s.reshape(TB * Lp, E).astype(w_ref.dtype), w_ref[...],
        preferred_element_type=jnp.float32,
    ).reshape(TB, Lp, E)

    act = jnp.tanh(jnp.sum(proj * t, axis=2))                        # (TB, Lp)
    act = act - jnp.max(act, axis=1, keepdims=True)
    p = jnp.exp(act)
    if valid_len != Lp:
        # Exclude padded L positions from the softmax (mask=0 alone would not,
        # matching the reference which keeps exp(0) terms for masked steps).
        lvalid = lax.broadcasted_iota(jnp.int32, (1, Lp), 1) < valid_len
        p = jnp.where(lvalid, p, 0.0)
    inv = pl.reciprocal(jnp.sum(p, axis=1, keepdims=True), approx=approx_recip)
    alpha = p * inv                                                  # (TB, Lp)

    att_ref[...] = jnp.sum(t * alpha[:, :, None], axis=1).astype(att_ref.dtype)


# --------------------------------------------------------------------------
# Kernel B: attended (B, E) @ receiver^T (E, N)
# --------------------------------------------------------------------------
def _project_kernel(att_ref, recv_t_ref, out_ref):
    out_ref[...] = jnp.dot(att_ref[...], recv_t_ref[...],
                           preferred_element_type=jnp.float32).astype(out_ref.dtype)


# --------------------------------------------------------------------------
# Wrapper
# --------------------------------------------------------------------------
def infvae_cascades_forward(params, examples, masks, *,
                            compute_dtype=jnp.bfloat16, out_dtype=None,
                            block_b=256, block_n=4096, gather_window=128):
    """Pallas-backed forward pass of InfVAECascades."""
    B, L = examples.shape
    N, E = params["receiver"].shape
    cdt = jnp.dtype(compute_dtype)
    odt = cdt if out_dtype is None else jnp.dtype(out_dtype)

    cap = _vmem_cap_bytes()

    # ---- tiling (quantum-aligned; shrink to fit the VMEM cap) --------------
    Lp = _round_up(L, 8)
    bb = block_b
    TB = _choose_tile(B, bb, 8)
    while _attn_vmem_bytes(TB, Lp, E, cdt.itemsize) > cap and TB > 8:
        bb = max(8, bb // 2)
        TB = _choose_tile(B, bb, 8)
    bn = block_n
    TN = _choose_tile(N, bn, 128)
    while _gemm_vmem_bytes(TB, TN, E, cdt.itemsize, odt.itemsize) > cap and TN > 128:
        bn = max(128, bn // 2)
        TN = _choose_tile(N, bn, 128)
    B_pad = _round_up(B, TB)
    N_pad = _round_up(N, TN)

    # ---- pad only the tiny index / mask / position arrays ------------------
    ex = examples.astype(jnp.int32)
    mk = masks.astype(jnp.float32)
    if (B_pad, Lp) != (B, L):
        ex = jnp.pad(ex, ((0, B_pad - B), (0, Lp - L)))
        mk = jnp.pad(mk, ((0, B_pad - B), (0, Lp - L)))
    ex_flat = ex.reshape(-1)                     # (B_pad*Lp,) int32 -> SMEM prefetch

    pos = params["position"].astype(cdt)
    if Lp != L:
        pos = jnp.pad(pos, ((0, Lp - L), (0, 0)))
    w = params["co_attn_wts"].astype(cdt)
    sender_tab = params["sender"].astype(cdt)       # stays in HBM (pl.ANY)
    temporal_tab = params["temporal"].astype(cdt)   # stays in HBM (pl.ANY)

    attn_kernel = functools.partial(
        _attention_kernel, valid_len=L, window=gather_window,
        approx_recip=(cdt == jnp.dtype(jnp.bfloat16)))

    attended = pl.pallas_call(
        attn_kernel,
        out_shape=jax.ShapeDtypeStruct((B_pad, E), cdt),
        grid_spec=pltpu.PrefetchScalarGridSpec(
            num_scalar_prefetch=1,
            grid=(B_pad // TB,),
            in_specs=[
                pl.BlockSpec((TB, Lp), lambda b, _ex: (b, 0)),      # masks
                pl.BlockSpec((Lp, E), lambda b, _ex: (0, 0)),       # position
                pl.BlockSpec((E, E), lambda b, _ex: (0, 0)),        # co-attn weights
                pl.BlockSpec(memory_space=pl.ANY),                  # sender table (HBM)
                pl.BlockSpec(memory_space=pl.ANY),                  # temporal table (HBM)
            ],
            out_specs=pl.BlockSpec((TB, E), lambda b, _ex: (b, 0)),
            scratch_shapes=[
                pltpu.VMEM((TB * Lp, E), cdt),     # gathered sender rows
                pltpu.VMEM((TB * Lp, E), cdt),     # gathered temporal rows
                pltpu.SemaphoreType.DMA((2,)),
            ]),
        compiler_params=pltpu.CompilerParams(
            dimension_semantics=("parallel",),
            vmem_limit_bytes=cap),
    )(ex_flat, mk, pos, w, sender_tab, temporal_tab)

    # ---- final projection: lane-dense (B, E) x (E, N) GEMM -----------------
    # TODO(synk): cache recv_t across forward calls (transpose+cast is O(E*N)).
    recv_t = params["receiver"].T.astype(cdt)
    if N_pad != N:
        recv_t = jnp.pad(recv_t, ((0, 0), (0, N_pad - N)))

    out = pl.pallas_call(
        _project_kernel,
        out_shape=jax.ShapeDtypeStruct((B_pad, N_pad), odt),
        grid_spec=pltpu.PrefetchScalarGridSpec(
            num_scalar_prefetch=0,
            grid=(N_pad // TN, B_pad // TB),       # N outermost: recv_t streamed once
            in_specs=[
                pl.BlockSpec((TB, E), lambda n, b: (b, 0)),
                pl.BlockSpec((E, TN), lambda n, b: (0, n)),
            ],
            out_specs=pl.BlockSpec((TB, TN), lambda n, b: (b, n))),
        compiler_params=pltpu.CompilerParams(
            dimension_semantics=("parallel", "parallel"),
            vmem_limit_bytes=cap),
    )(attended, recv_t)

    if (B_pad, N_pad) != (B, N):
        out = out[:B, :N]
    return out


# --------------------------------------------------------------------------
# Pure-JAX reference (mirrors the PyTorch forward exactly)
# --------------------------------------------------------------------------
def infvae_cascades_reference(params, examples, masks):
    m = masks.astype(jnp.float32)[..., None]
    s = params["sender"][examples] * m
    t = params["temporal"][examples] * m + params["position"]
    proj = jnp.tensordot(s, params["co_attn_wts"], axes=([2], [0]))
    act = jnp.tanh(jnp.sum(proj * t, axis=2))
    alpha = jax.nn.softmax(act, axis=1)
    attended = jnp.sum(t * alpha[..., None], axis=1)
    return attended @ params["receiver"].T


def init_params(key, num_nodes, latent_dim, max_seq_length):
    sqrt3 = math.sqrt(3.0)
    ks = jax.random.split(key, 5)

    def u(k, shape):
        # matches (sqrt3 + sqrt3) * rand(...) - sqrt3  == U(-sqrt3, sqrt3)
        return jax.random.uniform(k, shape, jnp.float32, -sqrt3, sqrt3)

    return {
        "co_attn_wts": u(ks[0], (latent_dim, latent_dim)),
        "temporal":    u(ks[1], (num_nodes, latent_dim)),
        "receiver":    u(ks[2], (num_nodes, latent_dim)),
        "sender":      u(ks[3], (num_nodes, latent_dim)),
        "position":    u(ks[4], (max_seq_length, latent_dim)),
    }


if __name__ == "__main__":
    def run_case(num_nodes, latent_dim, max_seq_length, batch, key):
        k_params, k_ex, k_mask = jax.random.split(key, 3)
        params = init_params(k_params, num_nodes, latent_dim, max_seq_length)

        examples = jax.random.randint(
            k_ex, (batch, max_seq_length), 0, num_nodes, dtype=jnp.int32)
        masks = jax.random.bernoulli(
            k_mask, 0.8, (batch, max_seq_length)).astype(jnp.int32)
        masks = masks.at[:, 0].set(1)

        ref = infvae_cascades_reference(params, examples, masks)

        # f32 path: exact semantics, tight tolerance.
        out_f32 = jax.block_until_ready(
            infvae_cascades_forward(params, examples, masks,
                                    compute_dtype=jnp.float32))
        assert out_f32.shape == (batch, num_nodes), out_f32.shape
        assert jnp.allclose(out_f32, ref, rtol=1e-5, atol=1e-5), (
            float(jnp.max(jnp.abs(out_f32 - ref))))

        # bf16 path: compare against a reference on bf16-rounded params
        # (isolates the intended precision change from any kernel bug).
        params_bf = {k: v.astype(jnp.bfloat16).astype(jnp.float32)
                     for k, v in params.items()}
        ref_bf = infvae_cascades_reference(params_bf, examples, masks)
        out_bf16 = jax.block_until_ready(
            infvae_cascades_forward(params, examples, masks,
                                    compute_dtype=jnp.bfloat16))
        assert out_bf16.shape == (batch, num_nodes), out_bf16.shape
        assert jnp.allclose(out_bf16.astype(jnp.float32), ref_bf,
                            rtol=2e-2, atol=1e-1), (
            float(jnp.max(jnp.abs(out_bf16.astype(jnp.float32) - ref_bf))))

    key = jax.random.PRNGKey(0)
    k1, k2 = jax.random.split(key)
    # Small, module-consistent shapes.
    run_case(num_nodes=16, latent_dim=32, max_seq_length=8, batch=4, key=k1)
    # Exercises the B / L / N padding paths (L not a multiple of 8, etc.).
    run_case(num_nodes=20, latent_dim=32, max_seq_length=5, batch=3, key=k2)

    print("KERNEL_OK")
</pallas_src>

<mosaic_0001>
module attributes {stable_mosaic.version = 11 : i64} {
  func.func @_attention_kernel(%arg0: i32, %arg1: memref<64xi32, #tpu.memory_space<smem>>, %arg2: memref<8x8xf32, #tpu.memory_space<vmem>>, %arg3: memref<8x32xf32, #tpu.memory_space<vmem>>, %arg4: memref<32x32xf32, #tpu.memory_space<vmem>>, %arg5: memref<16x32xf32, #tpu.memory_space<any>>, %arg6: memref<16x32xf32, #tpu.memory_space<any>>, %arg7: memref<8x32xf32, #tpu.memory_space<vmem>>, %arg8: memref<64x32xf32, #tpu.memory_space<vmem>>, %arg9: memref<64x32xf32, #tpu.memory_space<vmem>>, %arg10: memref<2x!tpu.dma_semaphore, #tpu.memory_space<semaphore_mem>>) attributes {dimension_semantics = [#tpu.dimension_semantics<parallel>], iteration_bounds = array<i64: 1>, scalar_prefetch = 1 : i64, scratch_operands = 3 : i64, tpu.core_type = #tpu.core_type<tc>, window_params = [{transform_indices = @transform_0, window_bounds = array<i64: 8, 8>}, {pipeline_mode = #tpu.pipeline_mode<synchronous>, transform_indices = @transform_1, window_bounds = array<i64: 8, 32>}, {pipeline_mode = #tpu.pipeline_mode<synchronous>, transform_indices = @transform_2, window_bounds = array<i64: 32, 32>}, {}, {}, {transform_indices = @transform_5, window_bounds = array<i64: 8, 32>}]} {
    %c64_i32 = arith.constant 64 : i32
    %0 = arith.muli %arg0, %c64_i32 : i32
    %c0_i32 = arith.constant 0 : i32
    %c64_i32_0 = arith.constant 64 : i32
    %1 = arith.addi %c0_i32, %c64_i32_0 : i32
    %c1_i32 = arith.constant 1 : i32
    scf.for %arg11 = %c0_i32 to %1 step %c1_i32  : i32 {
      %c1_i32_21 = arith.constant 1 : i32
      %39 = arith.muli %arg11, %c1_i32_21 : i32
      %c0_i32_22 = arith.constant 0 : i32
      %40 = arith.addi %c0_i32_22, %39 : i32
      %41 = arith.addi %0, %40 : i32
      %42 = arith.index_cast %41 : i32 to index
      %43 = memref.load %arg1[%42] : memref<64xi32, #tpu.memory_space<smem>>
      %c0_i32_23 = arith.constant 0 : i32
      %c0_i32_24 = arith.constant 0 : i32
      %44 = tpu.memref_slice %arg5[%43, %c0_i32_24] : memref<16x32xf32, #tpu.memory_space<any>> -> memref<1x32xf32, #tpu.memory_space<any>>
      %c0_i32_25 = arith.constant 0 : i32
      %45 = tpu.memref_slice %arg8[%40, %c0_i32_25] : memref<64x32xf32, #tpu.memory_space<vmem>> -> memref<1x32xf32, #tpu.memory_space<vmem>>
      %46 = tpu.memref_slice %arg10[%c0_i32_23] : memref<2x!tpu.dma_semaphore, #tpu.memory_space<semaphore_mem>> -> memref<1x!tpu.dma_semaphore, #tpu.memory_space<semaphore_mem>>
      %47 = tpu.memref_squeeze %46 : memref<1x!tpu.dma_semaphore, #tpu.memory_space<semaphore_mem>> -> memref<!tpu.dma_semaphore, #tpu.memory_space<semaphore_mem>>
      tpu.enqueue_dma source(%44 : memref<1x32xf32, #tpu.memory_space<any>>) target(%45 : memref<1x32xf32, #tpu.memory_space<vmem>>) target_semaphore(%47 : memref<!tpu.dma_semaphore, #tpu.memory_space<semaphore_mem>>)
      %c1_i32_26 = arith.constant 1 : i32
      %c0_i32_27 = arith.constant 0 : i32
      %48 = tpu.memref_slice %arg6[%43, %c0_i32_27] : memref<16x32xf32, #tpu.memory_space<any>> -> memref<1x32xf32, #tpu.memory_space<any>>
      %c0_i32_28 = arith.constant 0 : i32
      %49 = tpu.memref_slice %arg9[%40, %c0_i32_28] : memref<64x32xf32, #tpu.memory_space<vmem>> -> memref<1x32xf32, #tpu.memory_space<vmem>>
      %50 = tpu.memref_slice %arg10[%c1_i32_26] : memref<2x!tpu.dma_semaphore, #tpu.memory_space<semaphore_mem>> -> memref<1x!tpu.dma_semaphore, #tpu.memory_space<semaphore_mem>>
      %51 = tpu.memref_squeeze %50 : memref<1x!tpu.dma_semaphore, #tpu.memory_space<semaphore_mem>> -> memref<!tpu.dma_semaphore, #tpu.memory_space<semaphore_mem>>
      tpu.enqueue_dma source(%48 : memref<1x32xf32, #tpu.memory_space<any>>) target(%49 : memref<1x32xf32, #tpu.memory_space<vmem>>) target_semaphore(%51 : memref<!tpu.dma_semaphore, #tpu.memory_space<semaphore_mem>>)
      %c64_i32_29 = arith.constant 64 : i32
      %52 = arith.cmpi sge, %40, %c64_i32_29 : i32
      %53 = arith.extui %52 : i1 to i32
      %c0_i32_30 = arith.constant 0 : i32
      %54 = arith.cmpi ne, %53, %c0_i32_30 : i32
      scf.if %54 {
        %c64_i32_31 = arith.constant 64 : i32
        %55 = arith.subi %40, %c64_i32_31 : i32
        %c0_i32_32 = arith.constant 0 : i32
        %c0_i32_33 = arith.constant 0 : i32
        %c0_i32_34 = arith.constant 0 : i32
        %56 = tpu.memref_slice %arg5[%c0_i32_33, %c0_i32_34] : memref<16x32xf32, #tpu.memory_space<any>> -> memref<1x32xf32, #tpu.memory_space<any>>
        %c0_i32_35 = arith.constant 0 : i32
        %57 = tpu.memref_slice %arg8[%55, %c0_i32_35] : memref<64x32xf32, #tpu.memory_space<vmem>> -> memref<1x32xf32, #tpu.memory_space<vmem>>
        %58 = tpu.memref_slice %arg10[%c0_i32_32] : memref<2x!tpu.dma_semaphore, #tpu.memory_space<semaphore_mem>> -> memref<1x!tpu.dma_semaphore, #tpu.memory_space<semaphore_mem>>
        %59 = tpu.memref_squeeze %58 : memref<1x!tpu.dma_semaphore, #tpu.memory_space<semaphore_mem>> -> memref<!tpu.dma_semaphore, #tpu.memory_space<semaphore_mem>>
        tpu.wait_dma2 semaphore(%59 : memref<!tpu.dma_semaphore, #tpu.memory_space<semaphore_mem>>) src(%56 : memref<1x32xf32, #tpu.memory_space<any>>) dst(%57 : memref<1x32xf32, #tpu.memory_space<vmem>>)
        %c1_i32_36 = arith.constant 1 : i32
        %c0_i32_37 = arith.constant 0 : i32
        %c0_i32_38 = arith.constant 0 : i32
        %60 = tpu.memref_slice %arg6[%c0_i32_37, %c0_i32_38] : memref<16x32xf32, #tpu.memory_space<any>> -> memref<1x32xf32, #tpu.memory_space<any>>
        %c0_i32_39 = arith.constant 0 : i32
        %61 = tpu.memref_slice %arg9[%55, %c0_i32_39] : memref<64x32xf32, #tpu.memory_space<vmem>> -> memref<1x32xf32, #tpu.memory_space<vmem>>
        %62 = tpu.memref_slice %arg10[%c1_i32_36] : memref<2x!tpu.dma_semaphore, #tpu.memory_space<semaphore_mem>> -> memref<1x!tpu.dma_semaphore, #tpu.memory_space<semaphore_mem>>
        %63 = tpu.memref_squeeze %62 : memref<1x!tpu.dma_semaphore, #tpu.memory_space<semaphore_mem>> -> memref<!tpu.dma_semaphore, #tpu.memory_space<semaphore_mem>>
        tpu.wait_dma2 semaphore(%63 : memref<!tpu.dma_semaphore, #tpu.memory_space<semaphore_mem>>) src(%60 : memref<1x32xf32, #tpu.memory_space<any>>) dst(%61 : memref<1x32xf32, #tpu.memory_space<vmem>>)
      } else {
      }
    }
    %c64_i32_1 = arith.constant 64 : i32
    %c0_i32_2 = arith.constant 0 : i32
    %c64_i32_3 = arith.constant 64 : i32
    %2 = arith.addi %c0_i32_2, %c64_i32_3 : i32
    %c1_i32_4 = arith.constant 1 : i32
    scf.for %arg11 = %c0_i32_2 to %2 step %c1_i32_4  : i32 {
      %c1_i32_21 = arith.constant 1 : i32
      %39 = arith.muli %arg11, %c1_i32_21 : i32
      %c0_i32_22 = arith.constant 0 : i32
      %40 = arith.addi %c0_i32_22, %39 : i32
      %c0_i32_23 = arith.constant 0 : i32
      %c0_i32_24 = arith.constant 0 : i32
      %c0_i32_25 = arith.constant 0 : i32
      %41 = tpu.memref_slice %arg5[%c0_i32_24, %c0_i32_25] : memref<16x32xf32, #tpu.memory_space<any>> -> memref<1x32xf32, #tpu.memory_space<any>>
      %c0_i32_26 = arith.constant 0 : i32
      %42 = tpu.memref_slice %arg8[%40, %c0_i32_26] : memref<64x32xf32, #tpu.memory_space<vmem>> -> memref<1x32xf32, #tpu.memory_space<vmem>>
      %43 = tpu.memref_slice %arg10[%c0_i32_23] : memref<2x!tpu.dma_semaphore, #tpu.memory_space<semaphore_mem>> -> memref<1x!tpu.dma_semaphore, #tpu.memory_space<semaphore_mem>>
      %44 = tpu.memref_squeeze %43 : memref<1x!tpu.dma_semaphore, #tpu.memory_space<semaphore_mem>> -> memref<!tpu.dma_semaphore, #tpu.memory_space<semaphore_mem>>
      tpu.wait_dma2 semaphore(%44 : memref<!tpu.dma_semaphore, #tpu.memory_space<semaphore_mem>>) src(%41 : memref<1x32xf32, #tpu.memory_space<any>>) dst(%42 : memref<1x32xf32, #tpu.memory_space<vmem>>)
      %c1_i32_27 = arith.constant 1 : i32
      %c0_i32_28 = arith.constant 0 : i32
      %c0_i32_29 = arith.constant 0 : i32
      %45 = tpu.memref_slice %arg6[%c0_i32_28, %c0_i32_29] : memref<16x32xf32, #tpu.memory_space<any>> -> memref<1x32xf32, #tpu.memory_space<any>>
      %c0_i32_30 = arith.constant 0 : i32
      %46 = tpu.memref_slice %arg9[%40, %c0_i32_30] : memref<64x32xf32, #tpu.memory_space<vmem>> -> memref<1x32xf32, #tpu.memory_space<vmem>>
      %47 = tpu.memref_slice %arg10[%c1_i32_27] : memref<2x!tpu.dma_semaphore, #tpu.memory_space<semaphore_mem>> -> memref<1x!tpu.dma_semaphore, #tpu.memory_space<semaphore_mem>>
      %48 = tpu.memref_squeeze %47 : memref<1x!tpu.dma_semaphore, #tpu.memory_space<semaphore_mem>> -> memref<!tpu.dma_semaphore, #tpu.memory_space<semaphore_mem>>
      tpu.wait_dma2 semaphore(%48 : memref<!tpu.dma_semaphore, #tpu.memory_space<semaphore_mem>>) src(%45 : memref<1x32xf32, #tpu.memory_space<any>>) dst(%46 : memref<1x32xf32, #tpu.memory_space<vmem>>)
    }
    %c64_i32_5 = arith.constant 64 : i32
    %c0 = arith.constant 0 : index
    %c0_6 = arith.constant 0 : index
    %3 = vector.load %arg2[%c0, %c0_6] : memref<8x8xf32, #tpu.memory_space<vmem>>, vector<8x8xf32>
    %4 = vector.shape_cast %3 : vector<8x8xf32> to vector<8x8x1xf32>
    %c0_7 = arith.constant 0 : index
    %c0_8 = arith.constant 0 : index
    %5 = vector.load %arg3[%c0_7, %c0_8] : memref<8x32xf32, #tpu.memory_space<vmem>>, vector<8x32xf32>
    %6 = vector.shape_cast %5 : vector<8x32xf32> to vector<1x8x32xf32>
    %c0_9 = arith.constant 0 : index
    %c0_10 = arith.constant 0 : index
    %7 = vector.load %arg8[%c0_9, %c0_10] : memref<64x32xf32, #tpu.memory_space<vmem>>, vector<64x32xf32>
    %8 = vector.shape_cast %7 : vector<64x32xf32> to vector<8x8x32xf32>
    %9 = vector.broadcast %4 : vector<8x8x1xf32> to vector<8x8x32xf32>
    %10 = arith.mulf %8, %9 : vector<8x8x32xf32>
    %c0_11 = arith.constant 0 : index
    %c0_12 = arith.constant 0 : index
    %11 = vector.load %arg9[%c0_11, %c0_12] : memref<64x32xf32, #tpu.memory_space<vmem>>, vector<64x32xf32>
    %12 = vector.shape_cast %11 : vector<64x32xf32> to vector<8x8x32xf32>
    %13 = vector.broadcast %4 : vector<8x8x1xf32> to vector<8x8x32xf32>
    %14 = arith.mulf %12, %13 : vector<8x8x32xf32>
    %15 = vector.broadcast %6 : vector<1x8x32xf32> to vector<8x8x32xf32>
    %16 = arith.addf %14, %15 : vector<8x8x32xf32>
    %17 = vector.shape_cast %10 : vector<8x8x32xf32> to vector<64x32xf32>
    %c0_13 = arith.constant 0 : index
    %c0_14 = arith.constant 0 : index
    %18 = vector.load %arg4[%c0_13, %c0_14] : memref<32x32xf32, #tpu.memory_space<vmem>>, vector<32x32xf32>
    %cst = arith.constant dense<0.000000e+00> : vector<64x32xf32>
    %19 = tpu.matmul %17, %18, %cst {dimension_numbers = #tpu.dot_dimension_numbers<[1], [0], [0], [1], [0, 0, 1, 1], [], []>} : vector<64x32xf32>, vector<32x32xf32>, vector<64x32xf32> -> vector<64x32xf32>
    %20 = vector.shape_cast %19 : vector<64x32xf32> to vector<8x8x32xf32>
    %21 = arith.mulf %20, %16 : vector<8x8x32xf32>
    %cst_15 = arith.constant dense<0.000000e+00> : vector<8x8xf32>
    %22 = vector.multi_reduction <add>, %21, %cst_15 [2] : vector<8x8x32xf32> to vector<8x8xf32>
    %23 = math.tanh %22 : vector<8x8xf32>
    %cst_16 = arith.constant dense<0xFF800000> : vector<8xf32>
    %24 = vector.multi_reduction <maximumf>, %23, %cst_16 [1] : vector<8x8xf32> to vector<8xf32>
    %25 = vector.shape_cast %24 : vector<8xf32> to vector<8x1xf32>
    %26 = vector.broadcast %25 : vector<8x1xf32> to vector<8x8xf32>
    %27 = arith.subf %23, %26 : vector<8x8xf32>
    %28 = math.exp %27 : vector<8x8xf32>
    %cst_17 = arith.constant dense<0.000000e+00> : vector<8xf32>
    %29 = vector.multi_reduction <add>, %28, %cst_17 [1] : vector<8x8xf32> to vector<8xf32>
    %30 = vector.shape_cast %29 : vector<8xf32> to vector<8x1xf32>
    %31 = tpu.reciprocal %30 : vector<8x1xf32> -> vector<8x1xf32>
    %32 = vector.broadcast %31 : vector<8x1xf32> to vector<8x8xf32>
    %33 = arith.mulf %28, %32 : vector<8x8xf32>
    %34 = vector.shape_cast %33 : vector<8x8xf32> to vector<8x8x1xf32>
    %35 = vector.broadcast %34 : vector<8x8x1xf32> to vector<8x8x32xf32>
    %36 = arith.mulf %16, %35 : vector<8x8x32xf32>
    %cst_18 = arith.constant dense<0.000000e+00> : vector<8x32xf32>
    %37 = vector.multi_reduction <add>, %36, %cst_18 [1] : vector<8x8x32xf32> to vector<8x32xf32>
    %c0_19 = arith.constant 0 : index
    %c0_20 = arith.constant 0 : index
    %38 = vector.load %arg7[%c0_19, %c0_20] : memref<8x32xf32, #tpu.memory_space<vmem>>, vector<8x32xf32>
    tpu.vector_store %arg7[%c0_19, %c0_20], %37 {strides = array<i32>} : memref<8x32xf32, #tpu.memory_space<vmem>>, vector<8x32xf32>,
    return
  }
  func.func @transform_0(%arg0: i32, %arg1: memref<64xi32, #tpu.memory_space<smem>>) -> (i32, i32) {
    %c0_i32 = arith.constant 0 : i32
    %c0_i32_0 = arith.constant 0 : i32
    return %arg0, %c0_i32 : i32, i32
  }
  func.func @transform_1(%arg0: i32, %arg1: memref<64xi32, #tpu.memory_space<smem>>) -> (i32, i32) {
    %c0_i32 = arith.constant 0 : i32
    %c0_i32_0 = arith.constant 0 : i32
    %c0_i32_1 = arith.constant 0 : i32
    return %c0_i32, %c0_i32_0 : i32, i32
  }
  func.func @transform_2(%arg0: i32, %arg1: memref<64xi32, #tpu.memory_space<smem>>) -> (i32, i32) {
    %c0_i32 = arith.constant 0 : i32
    %c0_i32_0 = arith.constant 0 : i32
    %c0_i32_1 = arith.constant 0 : i32
    return %c0_i32, %c0_i32_0 : i32, i32
  }
  func.func @transform_5(%arg0: i32, %arg1: memref<64xi32, #tpu.memory_space<smem>>) -> (i32, i32) {
    %c0_i32 = arith.constant 0 : i32
    %c0_i32_0 = arith.constant 0 : i32
    return %arg0, %c0_i32 : i32, i32
  }
}

</mosaic_0001>

<llo_original>
// kernel: tpu_custom_call.1
$region0: #{tpu_custom_call.1}
  #allocation0 [shape = 'u32[]', space=smem, size = 0x4, offset = 0x4, fixed_abs, tag = 'smem constant byte address 0x4 - core index']
  #allocation1 [shape = 'u32[144,128]{1,0:T(1,128)}', space=vmem, size = 0x12000, scoped, tag = 'internal scratch']
  #allocation2 [shape = 'f32[64,32]{1,0:T(8,128)}', space=vmem, size = 0x8000, scoped, tag = 'scratch operand']
  #allocation3 [shape = 'f32[64,32]{1,0:T(8,128)}', space=vmem, size = 0x8000, scoped, tag = 'scratch operand']
  #allocation4 [shape = 's32[2]{0}', space=sflag, size = 0x8, scoped, tag = 'scratch operand']
  #allocation5 [shape = 's32[1]{0}', space=sflag, size = 0x4, scoped, tag = 'scoped memory for tpu_custom_call.1']
  #allocation6 [shape = 'u8[512]{0}', space=smem, size = 0x200, scoped, tag = 'prefetched SMEM operand 0']
  #allocation14 [shape = 's32[]', space=sflag, size = 0x4, offset = 0, fixed_abs, tag = 'sflag constant byte address 0x0 - dummy sync flag']
  #allocation15 [shape = 's32[]', space=sflag, size = 0x4, offset = 0, fixed_abs, tag = 'sflag constant byte address 0x0 - dummy sync flag']
  #allocation16 [shape = 'u32[]', space=smem, size = 0x4, offset = 0x44, fixed_abs, tag = 'smem constant byte address 0x44 - assertion arg 0']
  #allocation17 [shape = 'u32[]', space=smem, size = 0x4, offset = 0x48, fixed_abs, tag = 'smem constant byte address 0x48 - assertion arg 1']
  #allocation18 [shape = 's32[]', space=sflag, size = 0x4, offset = 0, fixed_abs, tag = 'sflag constant byte address 0x0 - dummy sync flag']
  %s0 = inlined_call_operand.hbm [shape: s32[64], index: 0, kind: input, shape index: {}]
  %s1 = inlined_call_operand.hbm [shape: f32[8,8], index: 1, kind: input, shape index: {}]
  %s2 = inlined_call_operand.hbm [shape: f32[8,32], index: 2, kind: input, shape index: {}]
  %s3 = inlined_call_operand.hbm [shape: f32[32,32], index: 3, kind: input, shape index: {}]
  %s4 = inlined_call_operand.hbm [shape: f32[16,32], index: 4, kind: input, shape index: {}]
  %s5 = inlined_call_operand.vmem [shape: f32[16,32], index: 5, kind: input, shape index: {}]
  %s6 = inlined_call_operand.hbm [shape: f32[8,32], index: 6, kind: output, shape index: {}]
  %s7 = sld [smem:[#allocation0]]
  $region86: #{tpu_custom_call.1} parent=0
    _
  %s9 = ssub.s32 1, %s7
  %s10 = scalar_select 0, %s9, %s7
  %12 = dma.hbm_to_smem %s0, 16, [#allocation6], [#allocation5]
  %13 = dma.done [#allocation5], 16
  %14 = sfence
  $region1: #{tpu_custom_call.1} parent=0
    #allocation7 [shape = 'u8[4096]{0}', space=vmem, size = 0x1000, scoped, tag = 'input window, operand 1, single buffered']
    #allocation8 [shape = 's32[1]{0}', space=sflag, size = 0x4, scoped, tag = 'scoped memory for tpu_custom_call.1']
    #allocation9 [shape = 's32[1]{0}', space=sflag, size = 0x4, scoped, tag = 'scoped memory for tpu_custom_call.1']
    #allocation10 [shape = 'u8[4096]{0}', space=vmem, size = 0x1000, scoped, tag = 'input window, operand 2, single buffered']
    #allocation11 [shape = 's32[1]{0}', space=sflag, size = 0x4, scoped, tag = 'scoped memory for tpu_custom_call.1']
    #allocation12 [shape = 'u8[16384]{0}', space=vmem, size = 0x4000, scoped, tag = 'input window, operand 3, single buffered']
    #allocation13 [shape = 'u8[4096]{0}', space=vmem, size = 0x1000, scoped, tag = 'output window, operand 0, single buffered']
    %15 = vsyncpa [#allocation8], 0
    %16 = vsyncpa [#allocation11], 0
    %17 = vsyncpa [#allocation9], 0
    // Predicated region
    $region2: #{tpu_custom_call.1} parent=1 // pred_check
      _
    $region3: #{tpu_custom_call.1} parent=1 // pred_check_branch
      %19 = sbr.rel (0) target = $region5
    $region4: #{tpu_custom_call.1} parent=1 // pred_region
      %s21 = ssub.s32 128, 128
      %22 = vsyncadd [#allocation8], %s21
      %s24 = sshll.u32 [#allocation7], 4
      %s25 = int_to_ptr.vmem [resolvable:$true] %s24
      %27 = dma.hbm_to_vmem [thread:$0]  %s1, 128, %s25, [#allocation8]
    $region5: #{tpu_custom_call.1} parent=1 // pred_fallthru
      _
    // Predicated region
    $region6: #{tpu_custom_call.1} parent=1 // pred_check
      _
    $region7: #{tpu_custom_call.1} parent=1 // pred_check_branch
      %29 = sbr.rel (0) target = $region9
    $region8: #{tpu_custom_call.1} parent=1 // pred_region
      %s31 = ssub.s32 128, 128
      %32 = vsyncadd [#allocation11], %s31
      %s34 = sshll.u32 [#allocation10], 4
      %s35 = int_to_ptr.vmem [resolvable:$true] %s34
      %37 = dma.hbm_to_vmem [thread:$0]  %s2, 128, %s35, [#allocation11]
    $region9: #{tpu_custom_call.1} parent=1 // pred_fallthru
      _
    // Predicated region
    $region10: #{tpu_custom_call.1} parent=1 // pred_check
      _
    $region11: #{tpu_custom_call.1} parent=1 // pred_check_branch
      %39 = sbr.rel (0) target = $region13
    $region12: #{tpu_custom_call.1} parent=1 // pred_region
      %s41 = ssub.s32 512, 512
      %42 = vsyncadd [#allocation11], %s41
      %s43 = sshll.u32 [#allocation12], 4
      %s44 = int_to_ptr.vmem [resolvable:$true] %s43
      %49 = dma.hbm_to_vmem [thread:$0]  %s3, 512, %s44, [#allocation11], 128, 128, 8
    $region13: #{tpu_custom_call.1} parent=1 // pred_fallthru
      _
    // Predicated region
    $region14: #{tpu_custom_call.1} parent=1 // pred_check
      _
    $region15: #{tpu_custom_call.1} parent=1 // pred_check_branch
      %51 = sbr.rel (0) target = $region17
    $region16: #{tpu_custom_call.1} parent=1 // pred_region
      %52 = dma.done [#allocation8], 128
    $region17: #{tpu_custom_call.1} parent=1 // pred_fallthru
      _
    // Predicated region
    $region18: #{tpu_custom_call.1} parent=1 // pred_check
      _
    $region19: #{tpu_custom_call.1} parent=1 // pred_check_branch
      %54 = sbr.rel (0) target = $region21
    $region20: #{tpu_custom_call.1} parent=1 // pred_region
      %55 = dma.done [#allocation11], 128
    $region21: #{tpu_custom_call.1} parent=1 // pred_fallthru
      _
    // Predicated region
    $region22: #{tpu_custom_call.1} parent=1 // pred_check
      _
    $region23: #{tpu_custom_call.1} parent=1 // pred_check_branch
      %57 = sbr.rel (0) target = $region25
    $region24: #{tpu_custom_call.1} parent=1 // pred_region
      %58 = dma.done [#allocation11], 512
    $region25: #{tpu_custom_call.1} parent=1 // pred_fallthru
      _
    %s59 = smul.u32 0, 64
    loop: start=0, step=1, limit=64
    $region26: #{tpu_custom_call.1} parent=1 // loop_pre_header
      _
    $region27: #{tpu_custom_call.1} parent=1 // loop_header
      %s61 = sphi 0, %s65
      %p62 = scmp.ge.s32.totalorder %s61, 64
    $region28: #{tpu_custom_call.1} parent=1 // loop_header_branch
      %64 = sbr.rel (%p62) target = $region32
    $region29: #{tpu_custom_call.1} parent=1 // loop_body
      %s66 = sadd.s32 %s59, %s61
      %s67 = sld [smem:[#allocation6 + %s66]]
      %s68 = smul.addr %s67, 16
      %s69 = scalar_lea.hbm %s4, %s68
      %s70 = scalar_lea.vmem [#allocation2], %s61
      // Predicated region
      $region33: #{tpu_custom_call.1} parent=29 // pred_check
        _
      $region34: #{tpu_custom_call.1} parent=29 // pred_check_branch
        %72 = sbr.rel target = $region36
      $region35: #{tpu_custom_call.1} parent=29 // pred_region
        %73 = sst [smem:[#allocation16]] [#allocation15]
        %74 = sst [smem:[#allocation17]] [#allocation14]
      $region36: #{tpu_custom_call.1} parent=29 // pred_fallthru
        _
      %76 = shalt.err (0)
      %s78 = sshll.u32 %s70, 4
      %s79 = int_to_ptr.vmem [resolvable:$true] %s78
      %81 = dma.hbm_to_vmem [thread:$0]  %s69, 16, %s79, [#allocation4]
      %s82 = scalar_lea.vmem %s5, %s67
      %s83 = scalar_lea.vmem [#allocation3], %s61
      %s84 = scalar_lea.sflag [#allocation4], 1
      %p86 = scmp.lt.u32.totalorder 1, 8
      %p87 = pneg %p86
      // Predicated region
      $region37: #{tpu_custom_call.1} parent=29 // pred_check
        _
      $region38: #{tpu_custom_call.1} parent=29 // pred_check_branch
        %89 = sbr.rel (%p86) target = $region40
      $region39: #{tpu_custom_call.1} parent=29 // pred_region
        %s104 = sand.u32 1, 7
        %p105 = scmp.eq.s32.totalorder %s104, 0
        %p106 = pneg %p105
        // Predicated region
        $region52: #{tpu_custom_call.1} parent=39 // pred_check
          _
        $region53: #{tpu_custom_call.1} parent=39 // pred_check_branch
          %108 = sbr.rel (%p105) target = $region55
        $region54: #{tpu_custom_call.1} parent=39 // pred_region
          %s109 = sand.u32 1, 7
          %s110 = ssub.s32 1, %s109
          %s111 = scalar_lea.vmem %s82, %s110
          %s112 = ssub.s32 1, %s109
          %s113 = scalar_lea.vmem %s83, %s112 [#allocation3]
          %s114 = sshllo.u32 0, %s109
          loop: start=0, step=1, limit=1
          $region56: #{tpu_custom_call.1} parent=54 // loop_pre_header
            _
          $region57: #{tpu_custom_call.1} parent=54 // loop_header
            %s116 = sphi 0, %s120
            %p117 = scmp.ge.s32.totalorder %s116, 1
            %s121 = sphi %s111, %s111
            %s122 = sphi %s113, %s113
          $region58: #{tpu_custom_call.1} parent=54 // loop_header_branch
            %119 = sbr.rel (%p117) target = $region62
          $region59: #{tpu_custom_call.1} parent=54 // loop_body
            %v123 = vld [vmem:[%s121] sm:%s114]
            %124 = vst [vmem:[%s122] sm:%s114] %v123
          $region60: #{tpu_custom_call.1} parent=54 // loop_footer
            %s120 = sadd.s32 1, %s116
          $region61: #{tpu_custom_call.1} parent=54 // loop_footer_branch
            %115 = sbr.rel target = $region57
          $region62: #{tpu_custom_call.1} parent=54 // loop_exit
            _
        $region55: #{tpu_custom_call.1} parent=39 // pred_fallthru
          _
      $region40: #{tpu_custom_call.1} parent=29 // pred_fallthru
        _
      // Predicated region
      $region41: #{tpu_custom_call.1} parent=29 // pred_check
        %p90 = pneg %p86
      $region42: #{tpu_custom_call.1} parent=29 // pred_check_branch
        %92 = sbr.rel (%p90) target = $region44
      $region43: #{tpu_custom_call.1} parent=29 // pred_region
        %s93 = sshllo.u32 0, 1
        loop: start=0, step=1, limit=1
        $region45: #{tpu_custom_call.1} parent=43 // loop_pre_header
          _
        $region46: #{tpu_custom_call.1} parent=43 // loop_header
          %s95 = sphi 0, %s99
          %p96 = scmp.ge.s32.totalorder %s95, 1
          %s100 = sphi %s82, %s82
          %s101 = sphi %s83, %s83
        $region47: #{tpu_custom_call.1} parent=43 // loop_header_branch
          %98 = sbr.rel (%p96) target = $region51
        $region48: #{tpu_custom_call.1} parent=43 // loop_body
          %v102 = vld [vmem:[%s100] sm:%s93]
          %103 = vst [vmem:[%s101] sm:%s93] %v102
        $region49: #{tpu_custom_call.1} parent=43 // loop_footer
          %s99 = sadd.s32 1, %s95
        $region50: #{tpu_custom_call.1} parent=43 // loop_footer_branch
          %94 = sbr.rel target = $region46
        $region51: #{tpu_custom_call.1} parent=43 // loop_exit
          _
      $region44: #{tpu_custom_call.1} parent=29 // pred_fallthru
        _
      // Predicated region
      $region63: #{tpu_custom_call.1} parent=29 // pred_check
        _
      $region64: #{tpu_custom_call.1} parent=29 // pred_check_branch
        %127 = sbr.rel (0) target = $region66
      $region65: #{tpu_custom_call.1} parent=29 // pred_region
        %128 = vsyncadd %s84, 16
      $region66: #{tpu_custom_call.1} parent=29 // pred_fallthru
        _
      %p129 = scmp.ge.s32.totalorder %s61, 64
      // Predicated region
      $region67: #{tpu_custom_call.1} parent=29 // pred_check
        %p130 = pneg %p129
      $region68: #{tpu_custom_call.1} parent=29 // pred_check_branch
        %132 = sbr.rel (%p130) target = $region70
      $region69: #{tpu_custom_call.1} parent=29 // pred_region
        %s133 = smul.u32 1, 1
        %s134 = sshll.u32 %s133, 4
        %135 = dma.done [#allocation4], %s134
        %s136 = sshll.u32 %s133, 4
        %137 = dma.done %s84, %s136
      $region70: #{tpu_custom_call.1} parent=29 // pred_fallthru
        _
    $region30: #{tpu_custom_call.1} parent=1 // loop_footer
      %s65 = sadd.s32 1, %s61
    $region31: #{tpu_custom_call.1} parent=1 // loop_footer_branch
      %60 = sbr.rel target = $region27
    $region32: #{tpu_custom_call.1} parent=1 // loop_exit
      _
    loop: start=0, step=1, limit=64
    $region71: #{tpu_custom_call.1} parent=1 // loop_pre_header
      _
    $region72: #{tpu_custom_call.1} parent=1 // loop_header
      %s139 = sphi 0, %s143
      %p140 = scmp.ge.s32.totalorder %s139, 64
    $region73: #{tpu_custom_call.1} parent=1 // loop_header_branch
      %142 = sbr.rel (%p140) target = $region77
    $region74: #{tpu_custom_call.1} parent=1 // loop_body
      %s144 = smul.u32 1, 1
      %s145 = sshll.u32 %s144, 4
      %146 = dma.done [#allocation4], %s145
      %s147 = scalar_lea.sflag [#allocation4], 1
      %s148 = sshll.u32 %s144, 4
      %149 = dma.done %s147, %s148
    $region75: #{tpu_custom_call.1} parent=1 // loop_footer
      %s143 = sadd.s32 1, %s139
    $region76: #{tpu_custom_call.1} parent=1 // loop_footer_branch
      %138 = sbr.rel target = $region72
    $region77: #{tpu_custom_call.1} parent=1 // loop_exit
      _
    %v150 = vld [vmem:[#allocation7] sm:$0xff]
    %v151 = vlaneseq
    %v152 = vshrl.u32 %v151, 7
    %v153 = vsub.s32 0, %v152
    %v154 = vrot.slane %v150, %v153
    %156 = vbcast.lane.b32.xlu0 %v154, 256
    %v157 = vpop.permute.xlu0 %156
    %v158 = vlaneseq
    %v159 = vshrl.u32 %v158, 7
    %v160 = vsub.s32 1, %v159
    %v161 = vrot.slane %v150, %v160
    %163 = vbcast.lane.b32.xlu0 %v161, 256
    %v164 = vpop.permute.xlu0 %163
    %v165 = vlaneseq
    %v166 = vshrl.u32 %v165, 7
    %v167 = vsub.s32 2, %v166
    %v168 = vrot.slane %v150, %v167
    %170 = vbcast.lane.b32.xlu0 %v168, 256
    %v171 = vpop.permute.xlu0 %170
    %v172 = vlaneseq
    %v173 = vshrl.u32 %v172, 7
    %v174 = vsub.s32 3, %v173
    %v175 = vrot.slane %v150, %v174
    %177 = vbcast.lane.b32.xlu0 %v175, 256
    %v178 = vpop.permute.xlu0 %177
    %v179 = vlaneseq
    %v180 = vshrl.u32 %v179, 7
    %v181 = vsub.s32 4, %v180
    %v182 = vrot.slane %v150, %v181
    %184 = vbcast.lane.b32.xlu0 %v182, 256
    %v185 = vpop.permute.xlu0 %184
    %v186 = vlaneseq
    %v187 = vshrl.u32 %v186, 7
    %v188 = vsub.s32 5, %v187
    %v189 = vrot.slane %v150, %v188
    %191 = vbcast.lane.b32.xlu0 %v189, 256
    %v192 = vpop.permute.xlu0 %191
    %v193 = vlaneseq
    %v194 = vshrl.u32 %v193, 7
    %v195 = vsub.s32 6, %v194
    %v196 = vrot.slane %v150, %v195
    %198 = vbcast.lane.b32.xlu0 %v196, 256
    %v199 = vpop.permute.xlu0 %198
    %v200 = vlaneseq
    %v201 = vshrl.u32 %v200, 7
    %v202 = vsub.s32 7, %v201
    %v203 = vrot.slane %v150, %v202
    %205 = vbcast.lane.b32.xlu0 %v203, 256
    %v206 = vpop.permute.xlu0 %205
    %v207 = vld [vmem:[#allocation10] sm:$0xff]
    %v208 = vld [vmem:[#allocation2] sm:$0xff]
    %v209 = vld [vmem:[#allocation2 + $0x8] sm:$0xff]
    %v210 = vld [vmem:[#allocation2 + $0x10] sm:$0xff]
    %v211 = vld [vmem:[#allocation2 + $0x18] sm:$0xff]
    %v212 = vld [vmem:[#allocation2 + $0x20] sm:$0xff]
    %v213 = vld [vmem:[#allocation2 + $0x28] sm:$0xff]
    %v214 = vld [vmem:[#allocation2 + $0x30] sm:$0xff]
    %v215 = vld [vmem:[#allocation2 + $0x38] sm:$0xff]
    %v216 = vmul.f32 %v208, %v157
    %v217 = vmul.f32 %v209, %v164
    %v218 = vmul.f32 %v210, %v171
    %v219 = vmul.f32 %v211, %v178
    %v220 = vmul.f32 %v212, %v185
    %v221 = vmul.f32 %v213, %v192
    %v222 = vmul.f32 %v214, %v199
    %v223 = vmul.f32 %v215, %v206
    %v224 = vld [vmem:[#allocation3] sm:$0xff]
    %v225 = vld [vmem:[#allocation3 + $0x8] sm:$0xff]
    %v226 = vld [vmem:[#allocation3 + $0x10] sm:$0xff]
    %v227 = vld [vmem:[#allocation3 + $0x18] sm:$0xff]
    %v228 = vld [vmem:[#allocation3 + $0x20] sm:$0xff]
    %v229 = vld [vmem:[#allocation3 + $0x28] sm:$0xff]
    %v230 = vld [vmem:[#allocation3 + $0x30] sm:$0xff]
    %v231 = vld [vmem:[#allocation3 + $0x38] sm:$0xff]
    %v232 = vmul.f32 %v224, %v157
    %v233 = vmul.f32 %v225, %v164
    %v234 = vmul.f32 %v226, %v171
    %v235 = vmul.f32 %v227, %v178
    %v236 = vmul.f32 %v228, %v185
    %v237 = vmul.f32 %v229, %v192
    %v238 = vmul.f32 %v230, %v199
    %v239 = vmul.f32 %v231, %v206
    %v240 = vadd.f32 %v232, %v207
    %v241 = vadd.f32 %v233, %v207
    %v242 = vadd.f32 %v234, %v207
    %v243 = vadd.f32 %v235, %v207
    %v244 = vadd.f32 %v236, %v207
    %v245 = vadd.f32 %v237, %v207
    %v246 = vadd.f32 %v238, %v207
    %v247 = vadd.f32 %v239, %v207
    %v248 = vld [vmem:[#allocation12] sm:$0xff]
    %v249 = vld [vmem:[#allocation12 + $0x8] sm:$0xff]
    %v250 = vld [vmem:[#allocation12 + $0x10] sm:$0xff]
    %v251 = vld [vmem:[#allocation12 + $0x18] sm:$0xff]
    %vm252 = vcmask 261120
    %v254 = vsel %vm252, %v216, 0
    %v257 = vsel %vm252, %v217, 0
    %v260 = vsel %vm252, %v218, 0
    %v263 = vsel %vm252, %v219, 0
    %v266 = vsel %vm252, %v220, 0
    %v269 = vsel %vm252, %v221, 0
    %v272 = vsel %vm252, %v222, 0
    %v275 = vsel %vm252, %v223, 0
    %277 = vmatprep.subr.mxu0 0.0
    %278 = vmatpush1.msra.mxu0 %v248
    %279 = vmatprep.subr.mxu0 0.0
    %280 = vmatpush1.msra.mxu0 %v249
    %281 = vmatprep.subr.mxu0 0.0
    %282 = vmatpush1.msra.mxu0 %v250
    %283 = vmatprep.subr.mxu0 0.0
    %284 = vmatpush1.msra.mxu0 %v251
    %285 = vmatprep.subr.mxu0 0.0
    %286 = vmatpush1.msra.mxu0 0.0
    %287 = vmatprep.subr.mxu0 0.0
    %288 = vmatpush1.msra.mxu0 0.0
    %289 = vmatprep.subr.mxu0 0.0
    %290 = vmatpush1.msra.mxu0 0.0
    %291 = vmatprep.subr.mxu0 0.0
    %292 = vmatpush1.msra.mxu0 0.0
    %293 = vmatprep.subr.mxu0 0.0
    %294 = vmatpush1.msra.mxu0 0.0
    %295 = vmatprep.subr.mxu0 0.0
    %296 = vmatpush1.msra.mxu0 0.0
    %297 = vmatprep.subr.mxu0 0.0
    %298 = vmatpush1.msra.mxu0 0.0
    %299 = vmatprep.subr.mxu0 0.0
    %300 = vmatpush1.msra.mxu0 0.0
    %301 = vmatprep.subr.mxu0 0.0
    %302 = vmatpush1.msra.mxu0 0.0
    %303 = vmatprep.subr.mxu0 0.0
    %304 = vmatpush1.msra.mxu0 0.0
    %305 = vmatprep.subr.mxu0 0.0
    %306 = vmatpush1.msra.mxu0 0.0
    %307 = vmatprep.subr.mxu0 0.0
    %308 = vmatpush1.msra.mxu0 0.0
    %309 = vmatprep.subr.mxu0 0.0
    %310 = vmatpush1.msra.mxu0 0.0
    %311 = vmatprep.subr.mxu0 0.0
    %312 = vmatpush1.msra.mxu0 0.0
    %313 = vmatprep.subr.mxu0 0.0
    %314 = vmatpush1.msra.mxu0 0.0
    %315 = vmatprep.subr.mxu0 0.0
    %316 = vmatpush1.msra.mxu0 0.0
    %317 = vmatprep.subr.mxu0 0.0
    %318 = vmatpush1.msra.mxu0 0.0
    %319 = vmatprep.subr.mxu0 0.0
    %320 = vmatpush1.msra.mxu0 0.0
    %321 = vmatprep.subr.mxu0 0.0
    %322 = vmatpush1.msra.mxu0 0.0
    %323 = vmatprep.subr.mxu0 0.0
    %324 = vmatpush1.msra.mxu0 0.0
    %325 = vmatprep.subr.mxu0 0.0
    %326 = vmatpush1.msra.mxu0 0.0
    %327 = vmatprep.subr.mxu0 0.0
    %328 = vmatpush1.msra.mxu0 0.0
    %329 = vmatprep.subr.mxu0 0.0
    %330 = vmatpush1.msra.mxu0 0.0
    %331 = vmatprep.subr.mxu0 0.0
    %332 = vmatpush1.msra.mxu0 0.0
    %333 = vmatprep.subr.mxu0 0.0
    %334 = vmatpush1.msra.mxu0 0.0
    %335 = vmatprep.subr.mxu0 0.0
    %336 = vmatpush1.msra.mxu0 0.0
    %337 = vmatprep.subr.mxu0 0.0
    %338 = vmatpush1.msra.mxu0 0.0
    %339 = vmatprep.subr.mxu0 0.0
    %340 = vmatpush1.msra.mxu0 0.0
    %341 = vmatprep.mubr.f32.mxu0 0.0
    %342 = vmatmul.mubr.f32.gmra.mrb[0].mxu0 %v254
    %v343 = vpop.f32.mrb[0].mxu0
    %v344 = vadd.f32 0.0, %v343
    %v345 = vpop.f32.mrb[0].mxu0
    %346 = vmatprep.mubr.f32.mxu0 0.0
    %347 = vmatmul.mubr.f32.gmra.mrb[0].mxu0 %v257
    %v348 = vpop.f32.mrb[0].mxu0
    %v349 = vadd.f32 0.0, %v348
    %v350 = vpop.f32.mrb[0].mxu0
    %351 = vmatprep.mubr.f32.mxu0 0.0
    %352 = vmatmul.mubr.f32.gmra.mrb[0].mxu0 %v260
    %v353 = vpop.f32.mrb[0].mxu0
    %v354 = vadd.f32 0.0, %v353
    %v355 = vpop.f32.mrb[0].mxu0
    %356 = vmatprep.mubr.f32.mxu0 0.0
    %357 = vmatmul.mubr.f32.gmra.mrb[0].mxu0 %v263
    %v358 = vpop.f32.mrb[0].mxu0
    %v359 = vadd.f32 0.0, %v358
    %v360 = vpop.f32.mrb[0].mxu0
    %361 = vmatprep.mubr.f32.mxu0 0.0
    %362 = vmatmul.mubr.f32.gmra.mrb[0].mxu0 %v266
    %v363 = vpop.f32.mrb[0].mxu0
    %v364 = vadd.f32 0.0, %v363
    %v365 = vpop.f32.mrb[0].mxu0
    %366 = vmatprep.mubr.f32.mxu0 0.0
    %367 = vmatmul.mubr.f32.gmra.mrb[0].mxu0 %v269
    %v368 = vpop.f32.mrb[0].mxu0
    %v369 = vadd.f32 0.0, %v368
    %v370 = vpop.f32.mrb[0].mxu0
    %371 = vmatprep.mubr.f32.mxu0 0.0
    %372 = vmatmul.mubr.f32.gmra.mrb[0].mxu0 %v272
    %v373 = vpop.f32.mrb[0].mxu0
    %v374 = vadd.f32 0.0, %v373
    %v375 = vpop.f32.mrb[0].mxu0
    %376 = vmatprep.mubr.f32.mxu0 0.0
    %377 = vmatmul.mubr.f32.gmra.mrb[0].mxu0 %v275
    %v378 = vpop.f32.mrb[0].mxu0
    %v379 = vadd.f32 0.0, %v378
    %v380 = vpop.f32.mrb[0].mxu0
    %381 = vdwg.mxu0
    %v382 = vmul.f32 %v344, %v240
    %v383 = vmul.f32 %v349, %v241
    %v384 = vmul.f32 %v354, %v242
    %v385 = vmul.f32 %v359, %v243
    %v386 = vmul.f32 %v364, %v244
    %v387 = vmul.f32 %v369, %v245
    %v388 = vmul.f32 %v374, %v246
    %v389 = vmul.f32 %v379, %v247
    %v390 = vsel %vm252, %v382, 0.0
    %391 = vadd.xlane.f32.xlu0 %v390
    %v392 = vpop.xlane.xlu0 %391
    %v393 = vsel %vm252, %v383, 0.0
    %394 = vadd.xlane.f32.xlu0 %v393
    %v395 = vpop.xlane.xlu0 %394
    %v396 = vsel %vm252, %v384, 0.0
    %397 = vadd.xlane.f32.xlu0 %v396
    %v398 = vpop.xlane.xlu0 %397
    %v399 = vsel %vm252, %v385, 0.0
    %400 = vadd.xlane.f32.xlu0 %v399
    %v401 = vpop.xlane.xlu0 %400
    %v402 = vsel %vm252, %v386, 0.0
    %403 = vadd.xlane.f32.xlu0 %v402
    %v404 = vpop.xlane.xlu0 %403
    %v405 = vsel %vm252, %v387, 0.0
    %406 = vadd.xlane.f32.xlu0 %v405
    %v407 = vpop.xlane.xlu0 %406
    %v408 = vsel %vm252, %v388, 0.0
    %409 = vadd.xlane.f32.xlu0 %v408
    %v410 = vpop.xlane.xlu0 %409
    %v411 = vsel %vm252, %v389, 0.0
    %412 = vadd.xlane.f32.xlu0 %v411
    %v413 = vpop.xlane.xlu0 %412
    %v414 = vtanh.pop %v392
    %v415 = vtanh.pop %v395
    %v416 = vtanh.pop %v398
    %v417 = vtanh.pop %v401
    %v418 = vtanh.pop %v404
    %v419 = vtanh.pop %v407
    %v420 = vtanh.pop %v410
    %v421 = vtanh.pop %v413
    %v430 = vlaneseq
    %v431 = vand.u32 %v430, 127
    %v432 = vlaneseq
    %v433 = vshrl.u32 %v432, 7
    %v434 = vsub.s32 %v431, %v433
    %v435 = vrot.slane %v414, %v434
    %v436 = vlaneseq
    %v437 = vshrl.u32 %v436, 7
    %v438 = vsub.s32 %v431, %v437
    %v439 = vrot.slane %v415, %v438
    %v440 = vlaneseq
    %v441 = vshrl.u32 %v440, 7
    %v442 = vsub.s32 %v431, %v441
    %v443 = vrot.slane %v416, %v442
    %v444 = vlaneseq
    %v445 = vshrl.u32 %v444, 7
    %v446 = vsub.s32 %v431, %v445
    %v447 = vrot.slane %v417, %v446
    %v448 = vlaneseq
    %v449 = vshrl.u32 %v448, 7
    %v450 = vsub.s32 %v431, %v449
    %v451 = vrot.slane %v418, %v450
    %v452 = vlaneseq
    %v453 = vshrl.u32 %v452, 7
    %v454 = vsub.s32 %v431, %v453
    %v455 = vrot.slane %v419, %v454
    %v456 = vlaneseq
    %v457 = vshrl.u32 %v456, 7
    %v458 = vsub.s32 %v431, %v457
    %v459 = vrot.slane %v420, %v458
    %v460 = vlaneseq
    %v461 = vshrl.u32 %v460, 7
    %v462 = vsub.s32 %v431, %v461
    %v463 = vrot.slane %v421, %v462
    %vm464 = vcmask 1041409
    %v465 = vsel %vm464, %v439, %v435
    %vm466 = vcmask 1042434
    %v467 = vsel %vm466, %v443, %v465
    %vm468 = vcmask 1043459
    %v469 = vsel %vm468, %v447, %v467
    %vm470 = vcmask 1044484
    %v471 = vsel %vm470, %v451, %v469
    %vm472 = vcmask 1045509
    %v473 = vsel %vm472, %v455, %v471
    %vm474 = vcmask 1046534
    %v475 = vsel %vm474, %v459, %v473
    %vm476 = vcmask 1047559
    %v477 = vsel %vm476, %v463, %v475
    %vm479 = vcmask 64512
    %v480 = vsel %vm479, %v477, -inf
    %481 = vmax.xlane.f32.xlu0 %v480
    %v482 = vpop.xlane.xlu0 %481
    %v484 = vlaneseq
    %v485 = vshrl.u32 %v484, 7
    %v486 = vsub.s32 0, %v485
    %v487 = vrot.slane %v482, %v486
    %v488 = vlaneseq
    %v489 = vshrl.u32 %v488, 7
    %v490 = vsub.s32 1, %v489
    %v491 = vrot.slane %v482, %v490
    %v492 = vlaneseq
    %v493 = vshrl.u32 %v492, 7
    %v494 = vsub.s32 2, %v493
    %v495 = vrot.slane %v482, %v494
    %v496 = vlaneseq
    %v497 = vshrl.u32 %v496, 7
    %v498 = vsub.s32 3, %v497
    %v499 = vrot.slane %v482, %v498
    %v500 = vlaneseq
    %v501 = vshrl.u32 %v500, 7
    %v502 = vsub.s32 4, %v501
    %v503 = vrot.slane %v482, %v502
    %v504 = vlaneseq
    %v505 = vshrl.u32 %v504, 7
    %v506 = vsub.s32 5, %v505
    %v507 = vrot.slane %v482, %v506
    %v508 = vlaneseq
    %v509 = vshrl.u32 %v508, 7
    %v510 = vsub.s32 6, %v509
    %v511 = vrot.slane %v482, %v510
    %v512 = vlaneseq
    %v513 = vshrl.u32 %v512, 7
    %v514 = vsub.s32 7, %v513
    %v515 = vrot.slane %v482, %v514
    %v524 = vsub.f32 %v414, %v487
    %v525 = vsub.f32 %v415, %v491
    %v526 = vsub.f32 %v416, %v495
    %v527 = vsub.f32 %v417, %v499
    %v528 = vsub.f32 %v418, %v503
    %v529 = vsub.f32 %v419, %v507
    %v530 = vsub.f32 %v420, %v511
    %v531 = vsub.f32 %v421, %v515
    %v532 = vmul.f32 %v524, 1.442695
    %v533 = vpow.pop %v532
    %v534 = vmul.f32 %v525, 1.442695
    %v535 = vpow.pop %v534
    %v536 = vmul.f32 %v526, 1.442695
    %v537 = vpow.pop %v536
    %v538 = vmul.f32 %v527, 1.442695
    %v539 = vpow.pop %v538
    %v540 = vmul.f32 %v528, 1.442695
    %v541 = vpow.pop %v540
    %v542 = vmul.f32 %v529, 1.442695
    %v543 = vpow.pop %v542
    %v544 = vmul.f32 %v530, 1.442695
    %v545 = vpow.pop %v544
    %v546 = vmul.f32 %v531, 1.442695
    %v547 = vpow.pop %v546
    %556 = vset.pattern.permute.xlu0 0
    %557 = vperm.xlu0 %556, %v533
    %v558 = vpop.permute.xlu0 %557
    %559 = vset.pattern.permute.xlu0 0
    %560 = vperm.xlu0 %559, %v535
    %v561 = vpop.permute.xlu0 %560
    %562 = vset.pattern.permute.xlu0 0
    %563 = vperm.xlu0 %562, %v537
    %v564 = vpop.permute.xlu0 %563
    %565 = vset.pattern.permute.xlu0 0
    %566 = vperm.xlu0 %565, %v539
    %v567 = vpop.permute.xlu0 %566
    %568 = vset.pattern.permute.xlu0 0
    %569 = vperm.xlu0 %568, %v541
    %v570 = vpop.permute.xlu0 %569
    %571 = vset.pattern.permute.xlu0 0
    %572 = vperm.xlu0 %571, %v543
    %v573 = vpop.permute.xlu0 %572
    %574 = vset.pattern.permute.xlu0 0
    %575 = vperm.xlu0 %574, %v545
    %v576 = vpop.permute.xlu0 %575
    %577 = vset.pattern.permute.xlu0 0
    %578 = vperm.xlu0 %577, %v547
    %v579 = vpop.permute.xlu0 %578
    %v580 = vlaneseq
    %v581 = vshrl.u32 %v580, 7
    %v582 = vsub.s32 %v431, %v581
    %v583 = vrot.slane %v558, %v582
    %v584 = vlaneseq
    %v585 = vshrl.u32 %v584, 7
    %v586 = vsub.s32 %v431, %v585
    %v587 = vrot.slane %v561, %v586
    %v588 = vlaneseq
    %v589 = vshrl.u32 %v588, 7
    %v590 = vsub.s32 %v431, %v589
    %v591 = vrot.slane %v564, %v590
    %v592 = vlaneseq
    %v593 = vshrl.u32 %v592, 7
    %v594 = vsub.s32 %v431, %v593
    %v595 = vrot.slane %v567, %v594
    %v596 = vlaneseq
    %v597 = vshrl.u32 %v596, 7
    %v598 = vsub.s32 %v431, %v597
    %v599 = vrot.slane %v570, %v598
    %v600 = vlaneseq
    %v601 = vshrl.u32 %v600, 7
    %v602 = vsub.s32 %v431, %v601
    %v603 = vrot.slane %v573, %v602
    %v604 = vlaneseq
    %v605 = vshrl.u32 %v604, 7
    %v606 = vsub.s32 %v431, %v605
    %v607 = vrot.slane %v576, %v606
    %v608 = vlaneseq
    %v609 = vshrl.u32 %v608, 7
    %v610 = vsub.s32 %v431, %v609
    %v611 = vrot.slane %v579, %v610
    %v612 = vsel %vm464, %v587, %v583
    %v613 = vsel %vm466, %v591, %v612
    %v614 = vsel %vm468, %v595, %v613
    %v615 = vsel %vm470, %v599, %v614
    %v616 = vsel %vm472, %v603, %v615
    %v617 = vsel %vm474, %v607, %v616
    %v618 = vsel %vm476, %v611, %v617
    %v620 = vsel %vm479, %v618, 0.0
    %621 = vadd.xlane.f32.xlu0 %v620
    %v622 = vpop.xlane.xlu0 %621
    %v623 = vrcp.pop %v622
    %v625 = vlaneseq
    %v626 = vshrl.u32 %v625, 7
    %v627 = vsub.s32 0, %v626
    %v628 = vrot.slane %v623, %v627
    %v629 = vlaneseq
    %v630 = vshrl.u32 %v629, 7
    %v631 = vsub.s32 1, %v630
    %v632 = vrot.slane %v623, %v631
    %v633 = vlaneseq
    %v634 = vshrl.u32 %v633, 7
    %v635 = vsub.s32 2, %v634
    %v636 = vrot.slane %v623, %v635
    %v637 = vlaneseq
    %v638 = vshrl.u32 %v637, 7
    %v639 = vsub.s32 3, %v638
    %v640 = vrot.slane %v623, %v639
    %v641 = vlaneseq
    %v642 = vshrl.u32 %v641, 7
    %v643 = vsub.s32 4, %v642
    %v644 = vrot.slane %v623, %v643
    %v645 = vlaneseq
    %v646 = vshrl.u32 %v645, 7
    %v647 = vsub.s32 5, %v646
    %v648 = vrot.slane %v623, %v647
    %v649 = vlaneseq
    %v650 = vshrl.u32 %v649, 7
    %v651 = vsub.s32 6, %v650
    %v652 = vrot.slane %v623, %v651
    %v653 = vlaneseq
    %v654 = vshrl.u32 %v653, 7
    %v655 = vsub.s32 7, %v654
    %v656 = vrot.slane %v623, %v655
    %v665 = vmul.f32 %v533, %v628
    %v666 = vmul.f32 %v535, %v632
    %v667 = vmul.f32 %v537, %v636
    %v668 = vmul.f32 %v539, %v640
    %v669 = vmul.f32 %v541, %v644
    %v670 = vmul.f32 %v543, %v648
    %v671 = vmul.f32 %v545, %v652
    %v672 = vmul.f32 %v547, %v656
    %674 = vset.pattern.permute.xlu0 0
    %675 = vperm.xlu0 %674, %v665
    %v676 = vpop.permute.xlu0 %675
    %679 = vset.pattern.permute.xlu0 0
    %680 = vperm.xlu0 %679, %v666
    %v681 = vpop.permute.xlu0 %680
    %684 = vset.pattern.permute.xlu0 0
    %685 = vperm.xlu0 %684, %v667
    %v686 = vpop.permute.xlu0 %685
    %689 = vset.pattern.permute.xlu0 0
    %690 = vperm.xlu0 %689, %v668
    %v691 = vpop.permute.xlu0 %690
    %694 = vset.pattern.permute.xlu0 0
    %695 = vperm.xlu0 %694, %v669
    %v696 = vpop.permute.xlu0 %695
    %699 = vset.pattern.permute.xlu0 0
    %700 = vperm.xlu0 %699, %v670
    %v701 = vpop.permute.xlu0 %700
    %704 = vset.pattern.permute.xlu0 0
    %705 = vperm.xlu0 %704, %v671
    %v706 = vpop.permute.xlu0 %705
    %709 = vset.pattern.permute.xlu0 0
    %710 = vperm.xlu0 %709, %v672
    %v711 = vpop.permute.xlu0 %710
    %v713 = vmul.f32 %v240, %v676
    %v714 = vmul.f32 %v241, %v681
    %v715 = vmul.f32 %v242, %v686
    %v716 = vmul.f32 %v243, %v691
    %v717 = vmul.f32 %v244, %v696
    %v718 = vmul.f32 %v245, %v701
    %v719 = vmul.f32 %v246, %v706
    %v720 = vmul.f32 %v247, %v711
    %v721 = vsel %vm252, %v713, 0.0
    %v722 = vrot.slane %v721, 4
    %v723 = vadd.f32 %v721, %v722
    %v724 = vrot.slane %v723, 2
    %v725 = vadd.f32 %v723, %v724
    %v726 = vrot.slane %v725, 1
    %v727 = vadd.f32 %v725, %v726
    %v728 = vsel %vm252, %v714, 0.0
    %v729 = vrot.slane %v728, 4
    %v730 = vadd.f32 %v728, %v729
    %v731 = vrot.slane %v730, 2
    %v732 = vadd.f32 %v730, %v731
    %v733 = vrot.slane %v732, 1
    %v734 = vadd.f32 %v732, %v733
    %v735 = vsel %vm252, %v715, 0.0
    %v736 = vrot.slane %v735, 4
    %v737 = vadd.f32 %v735, %v736
    %v738 = vrot.slane %v737, 2
    %v739 = vadd.f32 %v737, %v738
    %v740 = vrot.slane %v739, 1
    %v741 = vadd.f32 %v739, %v740
    %v742 = vsel %vm252, %v716, 0.0
    %v743 = vrot.slane %v742, 4
    %v744 = vadd.f32 %v742, %v743
    %v745 = vrot.slane %v744, 2
    %v746 = vadd.f32 %v744, %v745
    %v747 = vrot.slane %v746, 1
    %v748 = vadd.f32 %v746, %v747
    %v749 = vsel %vm252, %v717, 0.0
    %v750 = vrot.slane %v749, 4
    %v751 = vadd.f32 %v749, %v750
    %v752 = vrot.slane %v751, 2
    %v753 = vadd.f32 %v751, %v752
    %v754 = vrot.slane %v753, 1
    %v755 = vadd.f32 %v753, %v754
    %v756 = vsel %vm252, %v718, 0.0
    %v757 = vrot.slane %v756, 4
    %v758 = vadd.f32 %v756, %v757
    %v759 = vrot.slane %v758, 2
    %v760 = vadd.f32 %v758, %v759
    %v761 = vrot.slane %v760, 1
    %v762 = vadd.f32 %v760, %v761
    %v763 = vsel %vm252, %v719, 0.0
    %v764 = vrot.slane %v763, 4
    %v765 = vadd.f32 %v763, %v764
    %v766 = vrot.slane %v765, 2
    %v767 = vadd.f32 %v765, %v766
    %v768 = vrot.slane %v767, 1
    %v769 = vadd.f32 %v767, %v768
    %v770 = vsel %vm252, %v720, 0.0
    %v771 = vrot.slane %v770, 4
    %v772 = vadd.f32 %v770, %v771
    %v773 = vrot.slane %v772, 2
    %v774 = vadd.f32 %v772, %v773
    %v775 = vrot.slane %v774, 1
    %v776 = vadd.f32 %v774, %v775
    %v785 = vsel %vm464, %v734, %v727
    %v786 = vsel %vm466, %v741, %v785
    %v787 = vsel %vm468, %v748, %v786
    %v788 = vsel %vm470, %v755, %v787
    %v789 = vsel %vm472, %v762, %v788
    %v790 = vsel %vm474, %v769, %v789
    %v791 = vsel %vm476, %v776, %v790
    %793 = vst.msk [vmem:[#allocation13] sm:$0xff] %vm252, %v791
    // Predicated region
    $region78: #{tpu_custom_call.1} parent=1 // pred_check
      _
    $region79: #{tpu_custom_call.1} parent=1 // pred_check_branch
      %795 = sbr.rel (0) target = $region81
    $region80: #{tpu_custom_call.1} parent=1 // pred_region
      %s797 = ssub.s32 128, 128
      %798 = vsyncadd [#allocation9], %s797
      %s800 = sshll.u32 [#allocation13], 4
      %s801 = int_to_ptr.vmem [resolvable:$true] %s800
      %803 = dma.vmem_to_hbm [thread:$0]  %s801, 128, %s6, [#allocation9]
    $region81: #{tpu_custom_call.1} parent=1 // pred_fallthru
      _
    // Predicated region
    $region82: #{tpu_custom_call.1} parent=1 // pred_check
      _
    $region83: #{tpu_custom_call.1} parent=1 // pred_check_branch
      %805 = sbr.rel (0) target = $region85
    $region84: #{tpu_custom_call.1} parent=1 // pred_region
      %806 = dma.done [#allocation9], 128
    $region85: #{tpu_custom_call.1} parent=1 // pred_fallthru
      _
    %807 = vsyncpa [#allocation8], 1
    %808 = vsyncpa [#allocation11], 1
    %809 = vsyncpa [#allocation9], 1
  %810 = vsyncmov [#allocation4]
  %s811 = vpop.sfrf %810
  %p812 = scmp.eq.s32.totalorder %s811, 0
  %p813 = pneg %p812
  %815 = shalt.err (%p813)
  %s816 = scalar_lea.sflag [#allocation4], 1
  %817 = vsyncmov %s816
  %s818 = vpop.sfrf %817
  %p819 = scmp.eq.s32.totalorder %s818, 0
  %p820 = pneg %p819
  %822 = shalt.err (%p820)

</llo_original>
